<compile_context>
chip_gen: v6e
topology: v6e:2x2x1
jax: 0.10.0
libtpu: 0.0.40
codegen_flags: <defaults>
</compile_context>

<pallas_src>
import jax
import jax.numpy as jnp
from jax import lax
from jax.experimental import pallas as pl
from jax.experimental.pallas import tpu as pltpu


def _silu(v):
    return v * jax.nn.sigmoid(v)


def _round_up(x, m):
    return ((x + m - 1) // m) * m


def _pad2d(a, rows, cols):
    return jnp.pad(a, ((0, rows - a.shape[0]), (0, cols - a.shape[1])))


# --------------------------------------------------------------------------
# Phase 1: edge_feat = He^T @ (X @ Theta), accumulated over node tiles.
# grid = (m_tiles, n_tiles); n (last axis) is the reduction.
# --------------------------------------------------------------------------
def _edge_kernel(x_ref, theta_ref, he_ref, edge_ref, acc_ref):
    n = pl.program_id(1)

    @pl.when(n == 0)
    def _():
        acc_ref[...] = jnp.zeros_like(acc_ref)

    # [TN, Cop] in f32 (MXU accumulates f32 from bf16 operands).
    xw = jnp.dot(x_ref[...], theta_ref[...], preferred_element_type=jnp.float32)

    # Contract He over its node (row) axis without materializing He.T
    # (avoids XLU transposes + VMEM copies of the [TN, TM] tile).
    acc_ref[...] += lax.dot_general(
        he_ref[...], xw.astype(he_ref.dtype),
        dimension_numbers=(((0,), (0,)), ((), ())),
        preferred_element_type=jnp.float32)

    @pl.when(n == pl.num_programs(1) - 1)
    def _():
        edge_ref[...] = acc_ref[...].astype(edge_ref.dtype)


# --------------------------------------------------------------------------
# Phase 2: hidden = SiLU((Hn @ edge_feat) @ Wp + b_fused), accumulated over
# hyperedge tiles.  grid = (n_tiles, m_tiles); m (last axis) is the reduction.
# --------------------------------------------------------------------------
def _node_kernel(hn_ref, edge_ref, wp_ref, bias_ref, out_ref, acc_ref):
    m = pl.program_id(1)

    @pl.when(m == 0)
    def _():
        acc_ref[...] = jnp.zeros_like(acc_ref)

    acc_ref[...] += jnp.dot(hn_ref[...], edge_ref[...],
                            preferred_element_type=jnp.float32)

    @pl.when(m == pl.num_programs(1) - 1)
    def _():
        hidden = jnp.dot(acc_ref[...].astype(wp_ref.dtype), wp_ref[...],
                         preferred_element_type=jnp.float32) + bias_ref[...]
        out_ref[...] = _silu(hidden).astype(out_ref.dtype)


# --------------------------------------------------------------------------
# Wrapper
# --------------------------------------------------------------------------
def downblock_forward(x, incidence, temb, params, *,
                      tile_n=256, tile_m=256, mxu_dtype=jnp.bfloat16):
    """Returns (hidden_state [N, C_out], res_out) matching the PyTorch module."""
    orig_x = x
    N, c_in = x.shape
    _, M = incidence.shape
    c_out = params["theta"].shape[1]
    f32 = jnp.float32

    x = x.astype(f32)
    H = incidence.astype(f32)

    # ---- hoisted normalizations (exact reciprocals; no transient inf) ----
    deg_n = jnp.sum(H, axis=1, keepdims=True)                     # [N, 1]
    dinv = jnp.where(deg_n > 0, 1.0 / jnp.maximum(deg_n, 1e-12), 0.0)
    deg_e = jnp.sum(H, axis=0, keepdims=True)                     # [1, M]
    binv = jnp.where(deg_e > 0, 1.0 / jnp.maximum(deg_e, 1e-12), 0.0)
    Hn = H * dinv                                                  # D^{-1} H
    He = H * binv                                                  # H B^{-1}

    # ---- hoisted temb path and fused bias ----
    t = _silu(temb.astype(f32)) @ params["wt"].astype(f32) + params["bt"].astype(f32)
    b_fused = (params["conv_bias"].astype(f32) @ params["wp"].astype(f32)
               + params["bp"].astype(f32) + t)                     # [1, Cout]

    # ---- pad to MXU / lane-dense shapes ----
    Np = _round_up(N, tile_n)
    Mp = _round_up(M, tile_m)
    Cip = _round_up(c_in, 128)
    Cop = _round_up(c_out, 128)

    xp = _pad2d(x, Np, Cip).astype(mxu_dtype)
    theta_p = _pad2d(params["theta"].astype(f32), Cip, Cop).astype(mxu_dtype)
    He_p = _pad2d(He, Np, Mp).astype(mxu_dtype)
    Hn_p = _pad2d(Hn, Np, Mp).astype(mxu_dtype)
    wp_p = _pad2d(params["wp"].astype(f32), Cop, Cop).astype(mxu_dtype)
    bias_p = _pad2d(b_fused, 1, Cop)                               # stays f32

    n_tiles = Np // tile_n
    m_tiles = Mp // tile_m

    # ---- phase 1: edge features ----
    edge_feat = pl.pallas_call(
        _edge_kernel,
        out_shape=jax.ShapeDtypeStruct((Mp, Cop), mxu_dtype),
        grid_spec=pltpu.PrefetchScalarGridSpec(
            num_scalar_prefetch=0,
            grid=(m_tiles, n_tiles),
            in_specs=[
                pl.BlockSpec((tile_n, Cip), lambda m, n: (n, 0)),      # x
                pl.BlockSpec((Cip, Cop), lambda m, n: (0, 0)),          # theta
                pl.BlockSpec((tile_n, tile_m), lambda m, n: (n, m)),    # He
            ],
            out_specs=pl.BlockSpec((tile_m, Cop), lambda m, n: (m, 0)),
            scratch_shapes=[pltpu.VMEM((tile_m, Cop), jnp.float32)],
        ),
        compiler_params=pltpu.CompilerParams(
            dimension_semantics=("parallel", "arbitrary")),
    )(xp, theta_p, He_p)

    # ---- phase 2: node features + proj + fused bias + SiLU ----
    hidden_p = pl.pallas_call(
        _node_kernel,
        out_shape=jax.ShapeDtypeStruct((Np, Cop), jnp.float32),
        grid_spec=pltpu.PrefetchScalarGridSpec(
            num_scalar_prefetch=0,
            grid=(n_tiles, m_tiles),
            in_specs=[
                pl.BlockSpec((tile_n, tile_m), lambda n, m: (n, m)),    # Hn
                pl.BlockSpec((tile_m, Cop), lambda n, m: (m, 0)),       # edge_feat
                pl.BlockSpec((Cop, Cop), lambda n, m: (0, 0)),          # wp
                pl.BlockSpec((1, Cop), lambda n, m: (0, 0)),            # fused bias
            ],
            out_specs=pl.BlockSpec((tile_n, Cop), lambda n, m: (n, 0)),
            scratch_shapes=[pltpu.VMEM((tile_n, Cop), jnp.float32)],
        ),
        compiler_params=pltpu.CompilerParams(
            dimension_semantics=("parallel", "arbitrary")),
    )(Hn_p, edge_feat, wp_p, bias_p)

    hidden = hidden_p[:N, :c_out]

    # ConvBlock returns res_out = (zeros_like(x),) when res_in is None (glue).
    res_out = (jnp.zeros_like(orig_x),)
    return hidden, res_out


# --------------------------------------------------------------------------
# Pure-JAX f32 reference of the same math
# --------------------------------------------------------------------------
def downblock_reference(x, incidence, temb, params):
    H = incidence.astype(jnp.float32)
    xw = x @ params["theta"]
    d = jnp.sum(H, axis=1, keepdims=True)
    dinv = jnp.where(d > 0, 1.0 / jnp.maximum(d, 1e-12), 0.0)
    b = jnp.sum(H, axis=0, keepdims=True)
    binv = jnp.where(b > 0, 1.0 / jnp.maximum(b, 1e-12), 0.0)
    edge = (H.T @ xw) * binv.T
    node = (H @ edge) * dinv
    conv_out = node + params["conv_bias"]
    hidden = conv_out @ params["wp"] + params["bp"]
    t = _silu(temb) @ params["wt"] + params["bt"]
    return _silu(hidden + t)


if __name__ == "__main__":
    # Small shapes implied by the module (node-feature graph data). Chosen so
    # the padded grid has multiple tiles along both N and M (exercises the
    # reduction accumulation and the parallel axis).
    N, M = 200, 176          # nodes, hyperedges
    C_IN, C_OUT = 24, 40     # in_channels, out_channels (heads=1)
    T = 64                   # temb_channels (512 in the module; small here)

    key = jax.random.PRNGKey(0)
    k_x, k_inc, k_temb, k_th, k_cb, k_wp, k_bp, k_wt, k_bt = jax.random.split(key, 9)

    x = jax.random.normal(k_x, (N, C_IN), dtype=jnp.float32)
    incidence = (jax.random.uniform(k_inc, (N, M)) < 0.3).astype(jnp.float32)
    temb = jax.random.normal(k_temb, (1, T), dtype=jnp.float32)

    params = {
        # HypergraphConv lin: Linear(C_IN, heads*C_OUT, bias=False) -> Theta
        "theta": jax.random.normal(k_th, (C_IN, C_OUT), dtype=jnp.float32) * 0.2,
        "conv_bias": jax.random.normal(k_cb, (1, C_OUT), dtype=jnp.float32) * 0.05,
        # proj_down: Linear(C_OUT*heads, C_OUT)
        "wp": jax.random.normal(k_wp, (C_OUT, C_OUT), dtype=jnp.float32) * 0.2,
        "bp": jax.random.normal(k_bp, (1, C_OUT), dtype=jnp.float32) * 0.05,
        # time_emb_proj: Linear(T, C_OUT)
        "wt": jax.random.normal(k_wt, (T, C_OUT), dtype=jnp.float32) * 0.1,
        "bt": jax.random.normal(k_bt, (1, C_OUT), dtype=jnp.float32) * 0.05,
    }

    ref = downblock_reference(x, incidence, temb, params)

    # f32 MXU path: tight check of the tiling / accumulation structure.
    hidden_f32, res_out = downblock_forward(
        x, incidence, temb, params,
        tile_n=128, tile_m=128, mxu_dtype=jnp.float32)
    hidden_f32 = jax.block_until_ready(hidden_f32)
    res_out = jax.block_until_ready(res_out)
    assert hidden_f32.shape == (N, C_OUT)
    assert res_out[0].shape == x.shape
    assert jnp.allclose(hidden_f32, ref, atol=1e-4, rtol=1e-4), (
        float(jnp.max(jnp.abs(hidden_f32 - ref))))

    # bf16 MXU path (production config): loose check against f32 reference.
    hidden_bf16, _ = downblock_forward(
        x, incidence, temb, params,
        tile_n=128, tile_m=128, mxu_dtype=jnp.bfloat16)
    hidden_bf16 = jax.block_until_ready(hidden_bf16)
    assert hidden_bf16.shape == (N, C_OUT)
    assert jnp.allclose(hidden_bf16, ref, atol=5e-2, rtol=5e-2), (
        float(jnp.max(jnp.abs(hidden_bf16 - ref))))

    print("KERNEL_OK")
</pallas_src>

<mosaic_0001>
module attributes {stable_mosaic.version = 11 : i64} {
  func.func @_edge_kernel(%arg0: i32, %arg1: i32, %arg2: memref<128x128xf32, #tpu.memory_space<vmem>>, %arg3: memref<128x128xf32, #tpu.memory_space<vmem>>, %arg4: memref<128x128xf32, #tpu.memory_space<vmem>>, %arg5: memref<128x128xf32, #tpu.memory_space<vmem>>, %arg6: memref<128x128xf32, #tpu.memory_space<vmem>>) attributes {dimension_semantics = [#tpu.dimension_semantics<parallel>, #tpu.dimension_semantics<arbitrary>], iteration_bounds = array<i64: 2, 2>, scalar_prefetch = 0 : i64, scratch_operands = 1 : i64, tpu.core_type = #tpu.core_type<tc>, window_params = [{transform_indices = @transform_0, window_bounds = array<i64: 128, 128>}, {pipeline_mode = #tpu.pipeline_mode<synchronous>, transform_indices = @transform_1, window_bounds = array<i64: 128, 128>}, {transform_indices = @transform_2, window_bounds = array<i64: 128, 128>}, {transform_indices = @transform_3, window_bounds = array<i64: 128, 128>}]} {
    %c0_i32 = arith.constant 0 : i32
    %0 = arith.cmpi eq, %arg1, %c0_i32 : i32
    %1 = arith.extui %0 : i1 to i32
    %c0_i32_0 = arith.constant 0 : i32
    %2 = arith.cmpi ne, %1, %c0_i32_0 : i32
    scf.if %2 {
      %cst_12 = arith.constant 0.000000e+00 : f32
      %14 = vector.broadcast %cst_12 : f32 to vector<128x128xf32>
      %c0_13 = arith.constant 0 : index
      %c0_14 = arith.constant 0 : index
      %15 = vector.load %arg6[%c0_13, %c0_14] : memref<128x128xf32, #tpu.memory_space<vmem>>, vector<128x128xf32>
      tpu.vector_store %arg6[%c0_13, %c0_14], %14 {strides = array<i32>} : memref<128x128xf32, #tpu.memory_space<vmem>>, vector<128x128xf32>,
    } else {
    }
    %c0 = arith.constant 0 : index
    %c0_1 = arith.constant 0 : index
    %3 = vector.load %arg2[%c0, %c0_1] : memref<128x128xf32, #tpu.memory_space<vmem>>, vector<128x128xf32>
    %c0_2 = arith.constant 0 : index
    %c0_3 = arith.constant 0 : index
    %4 = vector.load %arg3[%c0_2, %c0_3] : memref<128x128xf32, #tpu.memory_space<vmem>>, vector<128x128xf32>
    %cst = arith.constant dense<0.000000e+00> : vector<128x128xf32>
    %5 = tpu.matmul %3, %4, %cst {dimension_numbers = #tpu.dot_dimension_numbers<[1], [0], [0], [1], [0, 0, 1, 1], [], []>} : vector<128x128xf32>, vector<128x128xf32>, vector<128x128xf32> -> vector<128x128xf32>
    %c0_4 = arith.constant 0 : index
    %c0_5 = arith.constant 0 : index
    %6 = vector.load %arg6[%c0_4, %c0_5] : memref<128x128xf32, #tpu.memory_space<vmem>>, vector<128x128xf32>
    %c0_6 = arith.constant 0 : index
    %c0_7 = arith.constant 0 : index
    %7 = vector.load %arg4[%c0_6, %c0_7] : memref<128x128xf32, #tpu.memory_space<vmem>>, vector<128x128xf32>
    %cst_8 = arith.constant dense<0.000000e+00> : vector<128x128xf32>
    %8 = tpu.matmul %7, %5, %cst_8 {dimension_numbers = #tpu.dot_dimension_numbers<[0], [0], [1], [1], [0, 1, 1, 1], [], []>} : vector<128x128xf32>, vector<128x128xf32>, vector<128x128xf32> -> vector<128x128xf32>
    %9 = arith.addf %6, %8 : vector<128x128xf32>
    %c0_9 = arith.constant 0 : index
    %c0_10 = arith.constant 0 : index
    %10 = vector.load %arg6[%c0_9, %c0_10] : memref<128x128xf32, #tpu.memory_space<vmem>>, vector<128x128xf32>
    tpu.vector_store %arg6[%c0_9, %c0_10], %9 {strides = array<i32>} : memref<128x128xf32, #tpu.memory_space<vmem>>, vector<128x128xf32>,
    %c1_i32 = arith.constant 1 : i32
    %11 = arith.cmpi eq, %arg1, %c1_i32 : i32
    %12 = arith.extui %11 : i1 to i32
    %c0_i32_11 = arith.constant 0 : i32
    %13 = arith.cmpi ne, %12, %c0_i32_11 : i32
    scf.if %13 {
      %c0_12 = arith.constant 0 : index
      %c0_13 = arith.constant 0 : index
      %14 = vector.load %arg6[%c0_12, %c0_13] : memref<128x128xf32, #tpu.memory_space<vmem>>, vector<128x128xf32>
      %c0_14 = arith.constant 0 : index
      %c0_15 = arith.constant 0 : index
      %15 = vector.load %arg5[%c0_14, %c0_15] : memref<128x128xf32, #tpu.memory_space<vmem>>, vector<128x128xf32>
      tpu.vector_store %arg5[%c0_14, %c0_15], %14 {strides = array<i32>} : memref<128x128xf32, #tpu.memory_space<vmem>>, vector<128x128xf32>,
    } else {
    }
    return
  }
  func.func @transform_0(%arg0: i32, %arg1: i32) -> (i32, i32) {
    %c0_i32 = arith.constant 0 : i32
    %c0_i32_0 = arith.constant 0 : i32
    return %arg1, %c0_i32 : i32, i32
  }
  func.func @transform_1(%arg0: i32, %arg1: i32) -> (i32, i32) {
    %c0_i32 = arith.constant 0 : i32
    %c0_i32_0 = arith.constant 0 : i32
    %c0_i32_1 = arith.constant 0 : i32
    return %c0_i32, %c0_i32_0 : i32, i32
  }
  func.func @transform_2(%arg0: i32, %arg1: i32) -> (i32, i32) {
    %c0_i32 = arith.constant 0 : i32
    return %arg1, %arg0 : i32, i32
  }
  func.func @transform_3(%arg0: i32, %arg1: i32) -> (i32, i32) {
    %c0_i32 = arith.constant 0 : i32
    %c0_i32_0 = arith.constant 0 : i32
    return %arg0, %c0_i32 : i32, i32
  }
}

</mosaic_0001>

<llo_original>
// kernel: tpu_custom_call.1
$region0: #{tpu_custom_call.1}
  #allocation0 [shape = 'u32[]', space=smem, size = 0x4, offset = 0x4, fixed_abs, tag = 'smem constant byte address 0x4 - core index']
  #allocation1 [shape = 'u32[144,128]{1,0:T(1,128)}', space=vmem, size = 0x12000, scoped, tag = 'internal scratch']
  #allocation2 [shape = 'f32[128,128]{1,0:T(8,128)}', space=vmem, size = 0x10000, scoped, tag = 'scratch operand']
  %s0 = inlined_call_operand.hbm [shape: f32[256,128], index: 0, kind: input, shape index: {}]
  %s1 = inlined_call_operand.hbm [shape: f32[128,128], index: 1, kind: input, shape index: {}]
  %s2 = inlined_call_operand.hbm [shape: f32[256,256], index: 2, kind: input, shape index: {}]
  %s3 = inlined_call_operand.hbm [shape: f32[256,128], index: 3, kind: output, shape index: {}]
  %s4 = sld [smem:[#allocation0]]
  $region65: #{tpu_custom_call.1} parent=0
    _
  %s6 = ssub.s32 1, %s4
  %s7 = scalar_select 0, %s6, %s4
  $region1: #{tpu_custom_call.1} parent=0
    #allocation3 [shape = 'u8[131072]{0}', space=vmem, size = 0x20000, scoped, tag = 'input window, operand 0']
    #allocation4 [shape = 's32[2]{0}', space=sflag, size = 0x8, scoped, tag = 'scoped memory for tpu_custom_call.1']
    #allocation5 [shape = 's32[2]{0}', space=sflag, size = 0x8, scoped, tag = 'scoped memory for tpu_custom_call.1']
    #allocation6 [shape = 'u8[65536]{0}', space=vmem, size = 0x10000, scoped, tag = 'input window, operand 1, single buffered']
    #allocation7 [shape = 's32[1]{0}', space=sflag, size = 0x4, scoped, tag = 'scoped memory for tpu_custom_call.1']
    #allocation8 [shape = 'u8[131072]{0}', space=vmem, size = 0x20000, scoped, tag = 'input window, operand 2']
    #allocation9 [shape = 'u8[131072]{0}', space=vmem, size = 0x20000, scoped, tag = 'output window, operand 0']
    %8 = vsyncpa [#allocation4], 0
    %s9 = scalar_lea.sflag [#allocation4], 1
    %10 = vsyncpa %s9, 0
    %11 = vsyncpa [#allocation7], 0
    %12 = vsyncpa [#allocation5], 0
    %s13 = scalar_lea.sflag [#allocation5], 1
    %14 = vsyncpa %s13, 0
    loop: start=0, step=1, limit=6
    $region2: #{tpu_custom_call.1} parent=1 // loop_pre_header
      _
    $region3: #{tpu_custom_call.1} parent=1 // loop_header
      %s16 = sphi 0, %s20
      %p17 = scmp.ge.s32.totalorder %s16, 6
      %s23 = sphi 0, %s35
      %s24 = sphi 0, %s31
      %s25 = sphi 0, %s23
      %s26 = sphi 0, %s24
      %s27 = sphi 0, %s25
      %s28 = sphi 0, %s26
      %s38 = sphi 0, %s40
      %s41 = sphi 0, %s38
      %s42 = sphi 0, %s41
      %s58 = sphi 0, %s42
      %s62 = sphi 0, %s62
      %s64 = sphi 0, %s62
      %s65 = sphi 0, %s64
      %s79 = sphi 0, %s65
      %s87 = sphi 0, %s89
      %s90 = sphi 0, %s87
      %s91 = sphi 0, %s90
      %s107 = sphi 0, %s91
      %s113 = sphi 0, %s115
      %s116 = sphi 0, %s113
      %s117 = sphi 0, %s116
      %s133 = sphi 0, %s117
    $region4: #{tpu_custom_call.1} parent=1 // loop_header_branch
      %19 = sbr.rel (%p17) target = $region8
    $region5: #{tpu_custom_call.1} parent=1 // loop_body
      %s21 = ssub.s32 %s16, 1
      %s22 = ssub.s32 %s16, 2
      %s29 = sadd.s32 1, %s24
      %p30 = scmp.ge.s32.totalorder %s29, 2
      %s31 = scalar_select %p30, 0, %s29
      %s32 = sadd.s32 1, %s23
      %s33 = scalar_select %p30, %s32, %s23
      %p34 = scmp.ge.s32.totalorder %s33, 2
      %s35 = scalar_select %p34, 0, %s33
      %s36 = ssub.s32 %s24, %s31
      %p37 = scmp.eq.s32.totalorder %s36, 0
      %s39 = sadd.s32 %s38, 1
      %s40 = scalar_select %p37, %s38, %s39
      %p43 = pneg %p37
      %p44 = scmp.eq.s32.totalorder %s16, 3
      %p45 = por %p43, %p44
      %p46 = scmp.ne.s32.totalorder %s38, %s41
      %p47 = scmp.eq.s32.totalorder %s16, 0
      %p48 = por %p46, %p47
      %p49 = scmp.ne.s32.totalorder %s38, %s41
      %p50 = scmp.eq.s32.totalorder %s21, 3
      %p51 = por %p49, %p50
      %p52 = scmp.ne.s32.totalorder %s41, %s42
      %p53 = scmp.eq.s32.totalorder %s21, 0
      %p54 = por %p52, %p53
      %p55 = scmp.ne.s32.totalorder %s41, %s42
      %p56 = scmp.eq.s32.totalorder %s22, 3
      %p57 = por %p55, %p56
      %p59 = scmp.ne.s32.totalorder %s42, %s58
      %p60 = scmp.eq.s32.totalorder %s22, 0
      %p61 = por %p59, %p60
      %s63 = sadd.s32 %s62, 1
      %p66 = scmp.eq.s32.totalorder %s16, 3
      %p67 = scmp.ne.s32.totalorder %s62, %s64
      %p68 = scmp.eq.s32.totalorder %s16, 0
      %p69 = por %p67, %p68
      %p70 = scmp.ne.s32.totalorder %s62, %s64
      %p71 = scmp.eq.s32.totalorder %s21, 3
      %p72 = por %p70, %p71
      %p73 = scmp.ne.s32.totalorder %s64, %s65
      %p74 = scmp.eq.s32.totalorder %s21, 0
      %p75 = por %p73, %p74
      %p76 = scmp.ne.s32.totalorder %s64, %s65
      %p77 = scmp.eq.s32.totalorder %s22, 3
      %p78 = por %p76, %p77
      %p80 = scmp.ne.s32.totalorder %s65, %s79
      %p81 = scmp.eq.s32.totalorder %s22, 0
      %p82 = por %p80, %p81
      %s83 = ssub.s32 %s24, %s31
      %s84 = ssub.s32 %s23, %s35
      %s85 = sor.u32 %s83, %s84
      %p86 = scmp.eq.s32.totalorder %s85, 0
      %s88 = sadd.s32 %s87, 1
      %s89 = scalar_select %p86, %s87, %s88
      %p92 = pneg %p86
      %p93 = scmp.eq.s32.totalorder %s16, 3
      %p94 = por %p92, %p93
      %p95 = scmp.ne.s32.totalorder %s87, %s90
      %p96 = scmp.eq.s32.totalorder %s16, 0
      %p97 = por %p95, %p96
      %p98 = scmp.ne.s32.totalorder %s87, %s90
      %p99 = scmp.eq.s32.totalorder %s21, 3
      %p100 = por %p98, %p99
      %p101 = scmp.ne.s32.totalorder %s90, %s91
      %p102 = scmp.eq.s32.totalorder %s21, 0
      %p103 = por %p101, %p102
      %p104 = scmp.ne.s32.totalorder %s90, %s91
      %p105 = scmp.eq.s32.totalorder %s22, 3
      %p106 = por %p104, %p105
      %p108 = scmp.ne.s32.totalorder %s91, %s107
      %p109 = scmp.eq.s32.totalorder %s22, 0
      %p110 = por %p108, %p109
      %s111 = ssub.s32 %s23, %s35
      %p112 = scmp.eq.s32.totalorder %s111, 0
      %s114 = sadd.s32 %s113, 1
      %s115 = scalar_select %p112, %s113, %s114
      %p118 = pneg %p112
      %p119 = scmp.eq.s32.totalorder %s16, 3
      %p120 = por %p118, %p119
      %p121 = scmp.ne.s32.totalorder %s113, %s116
      %p122 = scmp.eq.s32.totalorder %s16, 0
      %p123 = por %p121, %p122
      %p124 = scmp.ne.s32.totalorder %s113, %s116
      %p125 = scmp.eq.s32.totalorder %s21, 3
      %p126 = por %p124, %p125
      %p127 = scmp.ne.s32.totalorder %s116, %s117
      %p128 = scmp.eq.s32.totalorder %s21, 0
      %p129 = por %p127, %p128
      %p130 = scmp.ne.s32.totalorder %s116, %s117
      %p131 = scmp.eq.s32.totalorder %s22, 3
      %p132 = por %p130, %p131
      %p134 = scmp.ne.s32.totalorder %s117, %s133
      %p135 = scmp.eq.s32.totalorder %s22, 0
      %p136 = por %p134, %p135
      %p137 = scmp.le.s32.totalorder 1, %s16
      %p138 = scmp.lt.s32.totalorder %s16, 5
      %p139 = pnand %p137, %p138
      %p140 = pneg %p139
      // Predicated region
      $region9: #{tpu_custom_call.1} parent=5 // pred_check
        _
      $region10: #{tpu_custom_call.1} parent=5 // pred_check_branch
        %142 = sbr.rel (%p139) target = $region12
      $region11: #{tpu_custom_call.1} parent=5 // pred_region
        %s143 = ssub.s32 %s16, 1
        // Predicated region
        $region13: #{tpu_custom_call.1} parent=11 // pred_check
          %p144 = pneg %p75
        $region14: #{tpu_custom_call.1} parent=11 // pred_check_branch
          %146 = sbr.rel (%p144) target = $region16
        $region15: #{tpu_custom_call.1} parent=11 // pred_region
          %s148 = ssub.s32 2048, 2048
          %149 = vsyncadd [#allocation7], %s148
          %s150 = sshll.u32 [#allocation6], 4
          %s151 = int_to_ptr.vmem [resolvable:$true] %s150
          %156 = dma.hbm_to_vmem [thread:$0]  %s1, 2048, %s151, [#allocation7], 128, 128, 8
        $region16: #{tpu_custom_call.1} parent=11 // pred_fallthru
          _
      $region12: #{tpu_custom_call.1} parent=5 // pred_fallthru
        _
      %p157 = scmp.lt.s32.totalorder %s16, 4
      // Predicated region
      $region17: #{tpu_custom_call.1} parent=5 // pred_check
        %p158 = pneg %p157
      $region18: #{tpu_custom_call.1} parent=5 // pred_check_branch
        %160 = sbr.rel (%p158) target = $region20
      $region19: #{tpu_custom_call.1} parent=5 // pred_region
        // Predicated region
        $region21: #{tpu_custom_call.1} parent=19 // pred_check
          %p161 = pneg %p48
        $region22: #{tpu_custom_call.1} parent=19 // pred_check_branch
          %163 = sbr.rel (%p161) target = $region24
        $region23: #{tpu_custom_call.1} parent=19 // pred_region
          %s164 = sand.u32 %s16, 1
          %s165 = scalar_lea.sflag [#allocation4], %s164
          %s166 = sand.u32 %s38, 1
          %s167 = smul.addr %s166, 128
          %s168 = scalar_lea.vmem [#allocation3], %s167
          %s169 = smul.u32 16, %s24
          %s171 = ssub.s32 2048, 2048
          %172 = vsyncadd %s165, %s171
          %s173 = smul.addr %s169, 128
          %s174 = scalar_lea.hbm %s0, %s173
          %s175 = sshll.u32 %s168, 4
          %s176 = int_to_ptr.vmem [resolvable:$true] %s175
          %181 = dma.hbm_to_vmem [thread:$0]  %s174, 2048, %s176, %s165, 128, 128, 8
        $region24: #{tpu_custom_call.1} parent=19 // pred_fallthru
          _
        // Predicated region
        $region25: #{tpu_custom_call.1} parent=19 // pred_check
          %p182 = pneg %p97
        $region26: #{tpu_custom_call.1} parent=19 // pred_check_branch
          %184 = sbr.rel (%p182) target = $region28
        $region27: #{tpu_custom_call.1} parent=19 // pred_region
          %s185 = sand.u32 %s16, 1
          %s186 = scalar_lea.sflag [#allocation4], %s185
          %s187 = sand.u32 %s87, 1
          %s188 = smul.addr %s187, 128
          %s189 = scalar_lea.vmem [#allocation8], %s188
          %s190 = smul.u32 16, %s24
          %s192 = ssub.s32 2048, 2048
          %193 = vsyncadd %s186, %s192
          %s194 = smul.addr %s190, 2
          %s195 = sadd.s32 %s23, %s194
          %s196 = smul.addr %s195, 128
          %s197 = scalar_lea.hbm %s2, %s196
          %s198 = sshll.u32 %s189, 4
          %s199 = int_to_ptr.vmem [resolvable:$true] %s198
          %204 = dma.hbm_to_vmem [thread:$0]  %s197, 2048, %s199, %s186, 256, 128, 8
        $region28: #{tpu_custom_call.1} parent=19 // pred_fallthru
          _
      $region20: #{tpu_custom_call.1} parent=5 // pred_fallthru
        _
      %p205 = scmp.le.s32.totalorder 1, %s16
      %p206 = scmp.lt.s32.totalorder %s16, 5
      %p207 = pnand %p205, %p206
      %p208 = pneg %p207
      // Predicated region
      $region29: #{tpu_custom_call.1} parent=5 // pred_check
        _
      $region30: #{tpu_custom_call.1} parent=5 // pred_check_branch
        %210 = sbr.rel (%p207) target = $region32
      $region31: #{tpu_custom_call.1} parent=5 // pred_region
        %s211 = ssub.s32 %s16, 1
        %s212 = sand.u32 %s21, 1
        %s213 = scalar_lea.sflag [#allocation4], %s212
        %s214 = sand.u32 %s41, 1
        %s215 = smul.addr %s214, 128
        %s216 = scalar_lea.vmem [#allocation3], %s215
        // Predicated region
        $region33: #{tpu_custom_call.1} parent=31 // pred_check
          %p217 = pneg %p54
        $region34: #{tpu_custom_call.1} parent=31 // pred_check_branch
          %219 = sbr.rel (%p217) target = $region36
        $region35: #{tpu_custom_call.1} parent=31 // pred_region
          %220 = dma.done %s213, 2048
        $region36: #{tpu_custom_call.1} parent=31 // pred_fallthru
          _
        // Predicated region
        $region37: #{tpu_custom_call.1} parent=31 // pred_check
          %p221 = pneg %p75
        $region38: #{tpu_custom_call.1} parent=31 // pred_check_branch
          %223 = sbr.rel (%p221) target = $region40
        $region39: #{tpu_custom_call.1} parent=31 // pred_region
          %224 = dma.done [#allocation7], 2048
        $region40: #{tpu_custom_call.1} parent=31 // pred_fallthru
          _
        %s225 = sand.u32 %s21, 1
        %s226 = scalar_lea.sflag [#allocation4], %s225
        %s227 = sand.u32 %s90, 1
        %s228 = smul.addr %s227, 128
        %s229 = scalar_lea.vmem [#allocation8], %s228
        // Predicated region
        $region41: #{tpu_custom_call.1} parent=31 // pred_check
          %p230 = pneg %p103
        $region42: #{tpu_custom_call.1} parent=31 // pred_check_branch
          %232 = sbr.rel (%p230) target = $region44
        $region43: #{tpu_custom_call.1} parent=31 // pred_region
          %233 = dma.done %s226, 2048
        $region44: #{tpu_custom_call.1} parent=31 // pred_fallthru
          _
        %s234 = sand.u32 %s21, 1
        %s235 = scalar_lea.sflag [#allocation4], %s234
        %s236 = sand.u32 %s41, 1
        %s237 = smul.addr %s236, 128
        %s238 = scalar_lea.vmem [#allocation3], %s237
        %p239 = pneg %p54
        %p240 = pneg %p51
        %p241 = pneg %p75
        %p242 = pneg %p72
        %s243 = sand.u32 %s21, 1
        %s244 = scalar_lea.sflag [#allocation4], %s243
        %s245 = sand.u32 %s90, 1
        %s246 = smul.addr %s245, 128
        %s247 = scalar_lea.vmem [#allocation8], %s246
        %p248 = pneg %p103
        %p249 = pneg %p100
        %p250 = pneg %p129
        %p251 = pneg %p126
        %s252 = sand.u32 %s116, 1
        %s253 = scalar_lea.sflag [#allocation5], %s252
        %s254 = sand.u32 %s116, 1
        %s255 = smul.addr %s254, 128
        %s256 = scalar_lea.vmem [#allocation9], %s255
        %s257 = smul.u32 16, %s26
        %s258 = smul.u32 16, %s26
        %s259 = smul.u32 16, %s25
        %p260 = scmp.eq.s32.totalorder %s26, 0
        // Predicated region
        $region45: #{tpu_custom_call.1} parent=31 // pred_check
          %p261 = pneg %p260
        $region46: #{tpu_custom_call.1} parent=31 // pred_check_branch
          %263 = sbr.rel (%p261) target = $region48
        $region47: #{tpu_custom_call.1} parent=31 // pred_region
          %264 = vst [vmem:[#allocation2] sm:$0xff] 0.0
          %265 = vst [vmem:[#allocation2 + $0x8] sm:$0xff] 0.0
          %266 = vst [vmem:[#allocation2 + $0x10] sm:$0xff] 0.0
          %267 = vst [vmem:[#allocation2 + $0x18] sm:$0xff] 0.0
          %268 = vst [vmem:[#allocation2 + $0x20] sm:$0xff] 0.0
          %269 = vst [vmem:[#allocation2 + $0x28] sm:$0xff] 0.0
          %270 = vst [vmem:[#allocation2 + $0x30] sm:$0xff] 0.0
          %271 = vst [vmem:[#allocation2 + $0x38] sm:$0xff] 0.0
          %272 = vst [vmem:[#allocation2 + $0x40] sm:$0xff] 0.0
          %273 = vst [vmem:[#allocation2 + $0x48] sm:$0xff] 0.0
          %274 = vst [vmem:[#allocation2 + $0x50] sm:$0xff] 0.0
          %275 = vst [vmem:[#allocation2 + $0x58] sm:$0xff] 0.0
          %276 = vst [vmem:[#allocation2 + $0x60] sm:$0xff] 0.0
          %277 = vst [vmem:[#allocation2 + $0x68] sm:$0xff] 0.0
          %278 = vst [vmem:[#allocation2 + $0x70] sm:$0xff] 0.0
          %279 = vst [vmem:[#allocation2 + $0x78] sm:$0xff] 0.0
        $region48: #{tpu_custom_call.1} parent=31 // pred_fallthru
          _
        %v280 = vld [vmem:[%s216] sm:$0xff]
        %v281 = vld [vmem:[%s216 + $0x8] sm:$0xff]
        %v282 = vld [vmem:[%s216 + $0x10] sm:$0xff]
        %v283 = vld [vmem:[%s216 + $0x18] sm:$0xff]
        %v284 = vld [vmem:[%s216 + $0x20] sm:$0xff]
        %v285 = vld [vmem:[%s216 + $0x28] sm:$0xff]
        %v286 = vld [vmem:[%s216 + $0x30] sm:$0xff]
        %v287 = vld [vmem:[%s216 + $0x38] sm:$0xff]
        %v288 = vld [vmem:[%s216 + $0x40] sm:$0xff]
        %v289 = vld [vmem:[%s216 + $0x48] sm:$0xff]
        %v290 = vld [vmem:[%s216 + $0x50] sm:$0xff]
        %v291 = vld [vmem:[%s216 + $0x58] sm:$0xff]
        %v292 = vld [vmem:[%s216 + $0x60] sm:$0xff]
        %v293 = vld [vmem:[%s216 + $0x68] sm:$0xff]
        %v294 = vld [vmem:[%s216 + $0x70] sm:$0xff]
        %v295 = vld [vmem:[%s216 + $0x78] sm:$0xff]
        %v296 = vld [vmem:[#allocation6] sm:$0xff]
        %v297 = vld [vmem:[#allocation6 + $0x8] sm:$0xff]
        %v298 = vld [vmem:[#allocation6 + $0x10] sm:$0xff]
        %v299 = vld [vmem:[#allocation6 + $0x18] sm:$0xff]
        %v300 = vld [vmem:[#allocation6 + $0x20] sm:$0xff]
        %v301 = vld [vmem:[#allocation6 + $0x28] sm:$0xff]
        %v302 = vld [vmem:[#allocation6 + $0x30] sm:$0xff]
        %v303 = vld [vmem:[#allocation6 + $0x38] sm:$0xff]
        %v304 = vld [vmem:[#allocation6 + $0x40] sm:$0xff]
        %v305 = vld [vmem:[#allocation6 + $0x48] sm:$0xff]
        %v306 = vld [vmem:[#allocation6 + $0x50] sm:$0xff]
        %v307 = vld [vmem:[#allocation6 + $0x58] sm:$0xff]
        %v308 = vld [vmem:[#allocation6 + $0x60] sm:$0xff]
        %v309 = vld [vmem:[#allocation6 + $0x68] sm:$0xff]
        %v310 = vld [vmem:[#allocation6 + $0x70] sm:$0xff]
        %v311 = vld [vmem:[#allocation6 + $0x78] sm:$0xff]
        %312 = vmatprep.subr.mxu0 0.0
        %313 = vmatpush1.msra.mxu0 %v311
        %314 = vmatprep.subr.mxu0 0.0
        %315 = vmatpush1.msra.mxu0 %v310
        %316 = vmatprep.subr.mxu0 0.0
        %317 = vmatpush1.msra.mxu0 %v309
        %318 = vmatprep.subr.mxu0 0.0
        %319 = vmatpush1.msra.mxu0 %v308
        %320 = vmatprep.subr.mxu0 0.0
        %321 = vmatpush1.msra.mxu0 %v307
        %322 = vmatprep.subr.mxu0 0.0
        %323 = vmatpush1.msra.mxu0 %v306
        %324 = vmatprep.subr.mxu0 0.0
        %325 = vmatpush1.msra.mxu0 %v305
        %326 = vmatprep.subr.mxu0 0.0
        %327 = vmatpush1.msra.mxu0 %v304
        %328 = vmatprep.subr.mxu0 0.0
        %329 = vmatpush1.msra.mxu0 %v303
        %330 = vmatprep.subr.mxu0 0.0
        %331 = vmatpush1.msra.mxu0 %v302
        %332 = vmatprep.subr.mxu0 0.0
        %333 = vmatpush1.msra.mxu0 %v301
        %334 = vmatprep.subr.mxu0 0.0
        %335 = vmatpush1.msra.mxu0 %v300
        %336 = vmatprep.subr.mxu0 0.0
        %337 = vmatpush1.msra.mxu0 %v299
        %338 = vmatprep.subr.mxu0 0.0
        %339 = vmatpush1.msra.mxu0 %v298
        %340 = vmatprep.subr.mxu0 0.0
        %341 = vmatpush1.msra.mxu0 %v297
        %342 = vmatprep.subr.mxu0 0.0
        %343 = vmatpush1.msra.mxu0 %v296
        %344 = vmatprep.subr.mxu0 0.0
        %345 = vmatpush2.msra.mxu0 0.0
        %346 = vmatprep.subr.mxu0 0.0
        %347 = vmatpush2.msra.mxu0 0.0
        %348 = vmatprep.subr.mxu0 0.0
        %349 = vmatpush2.msra.mxu0 0.0
        %350 = vmatprep.subr.mxu0 0.0
        %351 = vmatpush2.msra.mxu0 0.0
        %352 = vmatprep.subr.mxu0 0.0
        %353 = vmatpush2.msra.mxu0 0.0
        %354 = vmatprep.subr.mxu0 0.0
        %355 = vmatpush2.msra.mxu0 0.0
        %356 = vmatprep.subr.mxu0 0.0
        %357 = vmatpush2.msra.mxu0 0.0
        %358 = vmatprep.subr.mxu0 0.0
        %359 = vmatpush2.msra.mxu0 0.0
        %360 = vmatprep.subr.mxu0 0.0
        %361 = vmatpush2.msra.mxu0 0.0
        %362 = vmatprep.subr.mxu0 0.0
        %363 = vmatpush2.msra.mxu0 0.0
        %364 = vmatprep.subr.mxu0 0.0
        %365 = vmatpush2.msra.mxu0 0.0
        %366 = vmatprep.subr.mxu0 0.0
        %367 = vmatpush2.msra.mxu0 0.0
        %368 = vmatprep.subr.mxu0 0.0
        %369 = vmatpush2.msra.mxu0 0.0
        %370 = vmatprep.subr.mxu0 0.0
        %371 = vmatpush2.msra.mxu0 0.0
        %372 = vmatprep.subr.mxu0 0.0
        %373 = vmatpush2.msra.mxu0 0.0
        %374 = vmatprep.subr.mxu0 0.0
        %375 = vmatpush2.msra.mxu0 0.0
        %376 = vmatprep.mubr.f32.mxu0 0.0
        %377 = vmatmul.mubr.f32.gmra.mxu0 %v280
        %v378 = vpop.f32.mrf.mxu0
        %v379 = vadd.f32 0.0, %v378
        %v380 = vpop.f32.mrf.mxu0
        %381 = vmatprep.mubr.f32.mxu0 0.0
        %382 = vmatmul.mubr.f32.gmra.mxu0 %v281
        %v383 = vpop.f32.mrf.mxu0
        %v384 = vadd.f32 0.0, %v383
        %v385 = vpop.f32.mrf.mxu0
        %386 = vmatprep.mubr.f32.mxu0 0.0
        %387 = vmatmul.mubr.f32.gmra.mxu0 %v282
        %v388 = vpop.f32.mrf.mxu0
        %v389 = vadd.f32 0.0, %v388
        %v390 = vpop.f32.mrf.mxu0
        %391 = vmatprep.mubr.f32.mxu0 0.0
        %392 = vmatmul.mubr.f32.gmra.mxu0 %v283
        %v393 = vpop.f32.mrf.mxu0
        %v394 = vadd.f32 0.0, %v393
        %v395 = vpop.f32.mrf.mxu0
        %396 = vmatprep.mubr.f32.mxu0 0.0
        %397 = vmatmul.mubr.f32.gmra.mxu0 %v284
        %v398 = vpop.f32.mrf.mxu0
        %v399 = vadd.f32 0.0, %v398
        %v400 = vpop.f32.mrf.mxu0
        %401 = vmatprep.mubr.f32.mxu0 0.0
        %402 = vmatmul.mubr.f32.gmra.mxu0 %v285
        %v403 = vpop.f32.mrf.mxu0
        %v404 = vadd.f32 0.0, %v403
        %v405 = vpop.f32.mrf.mxu0
        %406 = vmatprep.mubr.f32.mxu0 0.0
        %407 = vmatmul.mubr.f32.gmra.mxu0 %v286
        %v408 = vpop.f32.mrf.mxu0
        %v409 = vadd.f32 0.0, %v408
        %v410 = vpop.f32.mrf.mxu0
        %411 = vmatprep.mubr.f32.mxu0 0.0
        %412 = vmatmul.mubr.f32.gmra.mxu0 %v287
        %v413 = vpop.f32.mrf.mxu0
        %v414 = vadd.f32 0.0, %v413
        %v415 = vpop.f32.mrf.mxu0
        %416 = vmatprep.mubr.f32.mxu0 0.0
        %417 = vmatmul.mubr.f32.gmra.mxu0 %v288
        %v418 = vpop.f32.mrf.mxu0
        %v419 = vadd.f32 0.0, %v418
        %v420 = vpop.f32.mrf.mxu0
        %421 = vmatprep.mubr.f32.mxu0 0.0
        %422 = vmatmul.mubr.f32.gmra.mxu0 %v289
        %v423 = vpop.f32.mrf.mxu0
        %v424 = vadd.f32 0.0, %v423
        %v425 = vpop.f32.mrf.mxu0
        %426 = vmatprep.mubr.f32.mxu0 0.0
        %427 = vmatmul.mubr.f32.gmra.mxu0 %v290
        %v428 = vpop.f32.mrf.mxu0
        %v429 = vadd.f32 0.0, %v428
        %v430 = vpop.f32.mrf.mxu0
        %431 = vmatprep.mubr.f32.mxu0 0.0
        %432 = vmatmul.mubr.f32.gmra.mxu0 %v291
        %v433 = vpop.f32.mrf.mxu0
        %v434 = vadd.f32 0.0, %v433
        %v435 = vpop.f32.mrf.mxu0
        %436 = vmatprep.mubr.f32.mxu0 0.0
        %437 = vmatmul.mubr.f32.gmra.mxu0 %v292
        %v438 = vpop.f32.mrf.mxu0
        %v439 = vadd.f32 0.0, %v438
        %v440 = vpop.f32.mrf.mxu0
        %441 = vmatprep.mubr.f32.mxu0 0.0
        %442 = vmatmul.mubr.f32.gmra.mxu0 %v293
        %v443 = vpop.f32.mrf.mxu0
        %v444 = vadd.f32 0.0, %v443
        %v445 = vpop.f32.mrf.mxu0
        %446 = vmatprep.mubr.f32.mxu0 0.0
        %447 = vmatmul.mubr.f32.gmra.mxu0 %v294
        %v448 = vpop.f32.mrf.mxu0
        %v449 = vadd.f32 0.0, %v448
        %v450 = vpop.f32.mrf.mxu0
        %451 = vmatprep.mubr.f32.mxu0 0.0
        %452 = vmatmul.mubr.f32.gmra.mxu0 %v295
        %v453 = vpop.f32.mrf.mxu0
        %v454 = vadd.f32 0.0, %v453
        %v455 = vpop.f32.mrf.mxu0
        %456 = vdwg.mxu0
        %v457 = vld [vmem:[#allocation2] sm:$0xff]
        %v458 = vld [vmem:[#allocation2 + $0x8] sm:$0xff]
        %v459 = vld [vmem:[#allocation2 + $0x10] sm:$0xff]
        %v460 = vld [vmem:[#allocation2 + $0x18] sm:$0xff]
        %v461 = vld [vmem:[#allocation2 + $0x20] sm:$0xff]
        %v462 = vld [vmem:[#allocation2 + $0x28] sm:$0xff]
        %v463 = vld [vmem:[#allocation2 + $0x30] sm:$0xff]
        %v464 = vld [vmem:[#allocation2 + $0x38] sm:$0xff]
        %v465 = vld [vmem:[#allocation2 + $0x40] sm:$0xff]
        %v466 = vld [vmem:[#allocation2 + $0x48] sm:$0xff]
        %v467 = vld [vmem:[#allocation2 + $0x50] sm:$0xff]
        %v468 = vld [vmem:[#allocation2 + $0x58] sm:$0xff]
        %v469 = vld [vmem:[#allocation2 + $0x60] sm:$0xff]
        %v470 = vld [vmem:[#allocation2 + $0x68] sm:$0xff]
        %v471 = vld [vmem:[#allocation2 + $0x70] sm:$0xff]
        %v472 = vld [vmem:[#allocation2 + $0x78] sm:$0xff]
        %v473 = vld [vmem:[%s229] sm:$0xff]
        %v474 = vld [vmem:[%s229 + $0x8] sm:$0xff]
        %v475 = vld [vmem:[%s229 + $0x10] sm:$0xff]
        %v476 = vld [vmem:[%s229 + $0x18] sm:$0xff]
        %v477 = vld [vmem:[%s229 + $0x20] sm:$0xff]
        %v478 = vld [vmem:[%s229 + $0x28] sm:$0xff]
        %v479 = vld [vmem:[%s229 + $0x30] sm:$0xff]
        %v480 = vld [vmem:[%s229 + $0x38] sm:$0xff]
        %v481 = vld [vmem:[%s229 + $0x40] sm:$0xff]
        %v482 = vld [vmem:[%s229 + $0x48] sm:$0xff]
        %v483 = vld [vmem:[%s229 + $0x50] sm:$0xff]
        %v484 = vld [vmem:[%s229 + $0x58] sm:$0xff]
        %v485 = vld [vmem:[%s229 + $0x60] sm:$0xff]
        %v486 = vld [vmem:[%s229 + $0x68] sm:$0xff]
        %v487 = vld [vmem:[%s229 + $0x70] sm:$0xff]
        %v488 = vld [vmem:[%s229 + $0x78] sm:$0xff]
        %489 = vxpose.xlu0.b32.start [1/16] %v473, 128
        %490 = vxpose.xlu0.b32.cont [2/16] %v474, 128
        %491 = vxpose.xlu0.b32.cont [3/16] %v475, 128
        %492 = vxpose.xlu0.b32.cont [4/16] %v476, 128
        %493 = vxpose.xlu0.b32.cont [5/16] %v477, 128
        %494 = vxpose.xlu0.b32.cont [6/16] %v478, 128
        %495 = vxpose.xlu0.b32.cont [7/16] %v479, 128
        %496 = vxpose.xlu0.b32.cont [8/16] %v480, 128
        %497 = vxpose.xlu0.b32.cont [9/16] %v481, 128
        %498 = vxpose.xlu0.b32.cont [10/16] %v482, 128
        %499 = vxpose.xlu0.b32.cont [11/16] %v483, 128
        %500 = vxpose.xlu0.b32.cont [12/16] %v484, 128
        %501 = vxpose.xlu0.b32.cont [13/16] %v485, 128
        %502 = vxpose.xlu0.b32.cont [14/16] %v486, 128
        %503 = vxpose.xlu0.b32.cont [15/16] %v487, 128
        %504 = vxpose.xlu0.b32.end [16/16] %v488, 128
        %v505 = vpop.trf.xlu0
        %v506 = vpop.trf.xlu0
        %v507 = vpop.trf.xlu0
        %v508 = vpop.trf.xlu0
        %v509 = vpop.trf.xlu0
        %v510 = vpop.trf.xlu0
        %v511 = vpop.trf.xlu0
        %v512 = vpop.trf.xlu0
        %v513 = vpop.trf.xlu0
        %v514 = vpop.trf.xlu0
        %v515 = vpop.trf.xlu0
        %v516 = vpop.trf.xlu0
        %v517 = vpop.trf.xlu0
        %v518 = vpop.trf.xlu0
        %v519 = vpop.trf.xlu0
        %v520 = vpop.trf.xlu0
        %521 = vmatprep.subr.mxu0 0.0
        %522 = vmatpush1.msra.mxu0 %v454
        %523 = vmatprep.subr.mxu0 0.0
        %524 = vmatpush1.msra.mxu0 %v449
        %525 = vmatprep.subr.mxu0 0.0
        %526 = vmatpush1.msra.mxu0 %v444
        %527 = vmatprep.subr.mxu0 0.0
        %528 = vmatpush1.msra.mxu0 %v439
        %529 = vmatprep.subr.mxu0 0.0
        %530 = vmatpush1.msra.mxu0 %v434
        %531 = vmatprep.subr.mxu0 0.0
        %532 = vmatpush1.msra.mxu0 %v429
        %533 = vmatprep.subr.mxu0 0.0
        %534 = vmatpush1.msra.mxu0 %v424
        %535 = vmatprep.subr.mxu0 0.0
        %536 = vmatpush1.msra.mxu0 %v419
        %537 = vmatprep.subr.mxu0 0.0
        %538 = vmatpush1.msra.mxu0 %v414
        %539 = vmatprep.subr.mxu0 0.0
        %540 = vmatpush1.msra.mxu0 %v409
        %541 = vmatprep.subr.mxu0 0.0
        %542 = vmatpush1.msra.mxu0 %v404
        %543 = vmatprep.subr.mxu0 0.0
        %544 = vmatpush1.msra.mxu0 %v399
        %545 = vmatprep.subr.mxu0 0.0
        %546 = vmatpush1.msra.mxu0 %v394
        %547 = vmatprep.subr.mxu0 0.0
        %548 = vmatpush1.msra.mxu0 %v389
        %549 = vmatprep.subr.mxu0 0.0
        %550 = vmatpush1.msra.mxu0 %v384
        %551 = vmatprep.subr.mxu0 0.0
        %552 = vmatpush1.msra.mxu0 %v379
        %553 = vmatprep.subr.mxu0 0.0
        %554 = vmatpush2.msra.mxu0 0.0
        %555 = vmatprep.subr.mxu0 0.0
        %556 = vmatpush2.msra.mxu0 0.0
        %557 = vmatprep.subr.mxu0 0.0
        %558 = vmatpush2.msra.mxu0 0.0
        %559 = vmatprep.subr.mxu0 0.0
        %560 = vmatpush2.msra.mxu0 0.0
        %561 = vmatprep.subr.mxu0 0.0
        %562 = vmatpush2.msra.mxu0 0.0
        %563 = vmatprep.subr.mxu0 0.0
        %564 = vmatpush2.msra.mxu0 0.0
        %565 = vmatprep.subr.mxu0 0.0
        %566 = vmatpush2.msra.mxu0 0.0
        %567 = vmatprep.subr.mxu0 0.0
        %568 = vmatpush2.msra.mxu0 0.0
        %569 = vmatprep.subr.mxu0 0.0
        %570 = vmatpush2.msra.mxu0 0.0
        %571 = vmatprep.subr.mxu0 0.0
        %572 = vmatpush2.msra.mxu0 0.0
        %573 = vmatprep.subr.mxu0 0.0
        %574 = vmatpush2.msra.mxu0 0.0
        %575 = vmatprep.subr.mxu0 0.0
        %576 = vmatpush2.msra.mxu0 0.0
        %577 = vmatprep.subr.mxu0 0.0
        %578 = vmatpush2.msra.mxu0 0.0
        %579 = vmatprep.subr.mxu0 0.0
        %580 = vmatpush2.msra.mxu0 0.0
        %581 = vmatprep.subr.mxu0 0.0
        %582 = vmatpush2.msra.mxu0 0.0
        %583 = vmatprep.subr.mxu0 0.0
        %584 = vmatpush2.msra.mxu0 0.0
        %585 = vmatprep.mubr.f32.mxu0 0.0
        %586 = vmatmul.mubr.f32.gmra.mxu0 %v505
        %v587 = vpop.f32.mrf.mxu0
        %v588 = vadd.f32 0.0, %v587
        %v589 = vpop.f32.mrf.mxu0
        %590 = vmatprep.mubr.f32.mxu0 0.0
        %591 = vmatmul.mubr.f32.gmra.mxu0 %v506
        %v592 = vpop.f32.mrf.mxu0
        %v593 = vadd.f32 0.0, %v592
        %v594 = vpop.f32.mrf.mxu0
        %595 = vmatprep.mubr.f32.mxu0 0.0
        %596 = vmatmul.mubr.f32.gmra.mxu0 %v507
        %v597 = vpop.f32.mrf.mxu0
        %v598 = vadd.f32 0.0, %v597
        %v599 = vpop.f32.mrf.mxu0
        %600 = vmatprep.mubr.f32.mxu0 0.0
        %601 = vmatmul.mubr.f32.gmra.mxu0 %v508
        %v602 = vpop.f32.mrf.mxu0
        %v603 = vadd.f32 0.0, %v602
        %v604 = vpop.f32.mrf.mxu0
        %605 = vmatprep.mubr.f32.mxu0 0.0
        %606 = vmatmul.mubr.f32.gmra.mxu0 %v509
        %v607 = vpop.f32.mrf.mxu0
        %v608 = vadd.f32 0.0, %v607
        %v609 = vpop.f32.mrf.mxu0
        %610 = vmatprep.mubr.f32.mxu0 0.0
        %611 = vmatmul.mubr.f32.gmra.mxu0 %v510
        %v612 = vpop.f32.mrf.mxu0
        %v613 = vadd.f32 0.0, %v612
        %v614 = vpop.f32.mrf.mxu0
        %615 = vmatprep.mubr.f32.mxu0 0.0
        %616 = vmatmul.mubr.f32.gmra.mxu0 %v511
        %v617 = vpop.f32.mrf.mxu0
        %v618 = vadd.f32 0.0, %v617
        %v619 = vpop.f32.mrf.mxu0
        %620 = vmatprep.mubr.f32.mxu0 0.0
        %621 = vmatmul.mubr.f32.gmra.mxu0 %v512
        %v622 = vpop.f32.mrf.mxu0
        %v623 = vadd.f32 0.0, %v622
        %v624 = vpop.f32.mrf.mxu0
        %625 = vmatprep.mubr.f32.mxu0 0.0
        %626 = vmatmul.mubr.f32.gmra.mxu0 %v513
        %v627 = vpop.f32.mrf.mxu0
        %v628 = vadd.f32 0.0, %v627
        %v629 = vpop.f32.mrf.mxu0
        %630 = vmatprep.mubr.f32.mxu0 0.0
        %631 = vmatmul.mubr.f32.gmra.mxu0 %v514
        %v632 = vpop.f32.mrf.mxu0
        %v633 = vadd.f32 0.0, %v632
        %v634 = vpop.f32.mrf.mxu0
        %635 = vmatprep.mubr.f32.mxu0 0.0
        %636 = vmatmul.mubr.f32.gmra.mxu0 %v515
        %v637 = vpop.f32.mrf.mxu0
        %v638 = vadd.f32 0.0, %v637
        %v639 = vpop.f32.mrf.mxu0
        %640 = vmatprep.mubr.f32.mxu0 0.0
        %641 = vmatmul.mubr.f32.gmra.mxu0 %v516
        %v642 = vpop.f32.mrf.mxu0
        %v643 = vadd.f32 0.0, %v642
        %v644 = vpop.f32.mrf.mxu0
        %645 = vmatprep.mubr.f32.mxu0 0.0
        %646 = vmatmul.mubr.f32.gmra.mxu0 %v517
        %v647 = vpop.f32.mrf.mxu0
        %v648 = vadd.f32 0.0, %v647
        %v649 = vpop.f32.mrf.mxu0
        %650 = vmatprep.mubr.f32.mxu0 0.0
        %651 = vmatmul.mubr.f32.gmra.mxu0 %v518
        %v652 = vpop.f32.mrf.mxu0
        %v653 = vadd.f32 0.0, %v652
        %v654 = vpop.f32.mrf.mxu0
        %655 = vmatprep.mubr.f32.mxu0 0.0
        %656 = vmatmul.mubr.f32.gmra.mxu0 %v519
        %v657 = vpop.f32.mrf.mxu0
        %v658 = vadd.f32 0.0, %v657
        %v659 = vpop.f32.mrf.mxu0
        %660 = vmatprep.mubr.f32.mxu0 0.0
        %661 = vmatmul.mubr.f32.gmra.mxu0 %v520
        %v662 = vpop.f32.mrf.mxu0
        %v663 = vadd.f32 0.0, %v662
        %v664 = vpop.f32.mrf.mxu0
        %665 = vdwg.mxu0
        %v666 = vadd.f32 %v457, %v588
        %v667 = vadd.f32 %v458, %v593
        %v668 = vadd.f32 %v459, %v598
        %v669 = vadd.f32 %v460, %v603
        %v670 = vadd.f32 %v461, %v608
        %v671 = vadd.f32 %v462, %v613
        %v672 = vadd.f32 %v463, %v618
        %v673 = vadd.f32 %v464, %v623
        %v674 = vadd.f32 %v465, %v628
        %v675 = vadd.f32 %v466, %v633
        %v676 = vadd.f32 %v467, %v638
        %v677 = vadd.f32 %v468, %v643
        %v678 = vadd.f32 %v469, %v648
        %v679 = vadd.f32 %v470, %v653
        %v680 = vadd.f32 %v471, %v658
        %v681 = vadd.f32 %v472, %v663
        %682 = vst [vmem:[#allocation2] sm:$0xff] %v666
        %683 = vst [vmem:[#allocation2 + $0x8] sm:$0xff] %v667
        %684 = vst [vmem:[#allocation2 + $0x10] sm:$0xff] %v668
        %685 = vst [vmem:[#allocation2 + $0x18] sm:$0xff] %v669
        %686 = vst [vmem:[#allocation2 + $0x20] sm:$0xff] %v670
        %687 = vst [vmem:[#allocation2 + $0x28] sm:$0xff] %v671
        %688 = vst [vmem:[#allocation2 + $0x30] sm:$0xff] %v672
        %689 = vst [vmem:[#allocation2 + $0x38] sm:$0xff] %v673
        %690 = vst [vmem:[#allocation2 + $0x40] sm:$0xff] %v674
        %691 = vst [vmem:[#allocation2 + $0x48] sm:$0xff] %v675
        %692 = vst [vmem:[#allocation2 + $0x50] sm:$0xff] %v676
        %693 = vst [vmem:[#allocation2 + $0x58] sm:$0xff] %v677
        %694 = vst [vmem:[#allocation2 + $0x60] sm:$0xff] %v678
        %695 = vst [vmem:[#allocation2 + $0x68] sm:$0xff] %v679
        %696 = vst [vmem:[#allocation2 + $0x70] sm:$0xff] %v680
        %697 = vst [vmem:[#allocation2 + $0x78] sm:$0xff] %v681
        %p698 = scmp.eq.s32.totalorder %s26, 1
        // Predicated region
        $region49: #{tpu_custom_call.1} parent=31 // pred_check
          %p699 = pneg %p698
        $region50: #{tpu_custom_call.1} parent=31 // pred_check_branch
          %701 = sbr.rel (%p699) target = $region52
        $region51: #{tpu_custom_call.1} parent=31 // pred_region
          %v702 = vld [vmem:[#allocation2] sm:$0xff]
          %v703 = vld [vmem:[#allocation2 + $0x8] sm:$0xff]
          %v704 = vld [vmem:[#allocation2 + $0x10] sm:$0xff]
          %v705 = vld [vmem:[#allocation2 + $0x18] sm:$0xff]
          %v706 = vld [vmem:[#allocation2 + $0x20] sm:$0xff]
          %v707 = vld [vmem:[#allocation2 + $0x28] sm:$0xff]
          %v708 = vld [vmem:[#allocation2 + $0x30] sm:$0xff]
          %v709 = vld [vmem:[#allocation2 + $0x38] sm:$0xff]
          %v710 = vld [vmem:[#allocation2 + $0x40] sm:$0xff]
          %v711 = vld [vmem:[#allocation2 + $0x48] sm:$0xff]
          %v712 = vld [vmem:[#allocation2 + $0x50] sm:$0xff]
          %v713 = vld [vmem:[#allocation2 + $0x58] sm:$0xff]
          %v714 = vld [vmem:[#allocation2 + $0x60] sm:$0xff]
          %v715 = vld [vmem:[#allocation2 + $0x68] sm:$0xff]
          %v716 = vld [vmem:[#allocation2 + $0x70] sm:$0xff]
          %v717 = vld [vmem:[#allocation2 + $0x78] sm:$0xff]
          %718 = vst [vmem:[%s256] sm:$0xff] %v702
          %719 = vst [vmem:[%s256 + $0x8] sm:$0xff] %v703
          %720 = vst [vmem:[%s256 + $0x10] sm:$0xff] %v704
          %721 = vst [vmem:[%s256 + $0x18] sm:$0xff] %v705
          %722 = vst [vmem:[%s256 + $0x20] sm:$0xff] %v706
          %723 = vst [vmem:[%s256 + $0x28] sm:$0xff] %v707
          %724 = vst [vmem:[%s256 + $0x30] sm:$0xff] %v708
          %725 = vst [vmem:[%s256 + $0x38] sm:$0xff] %v709
          %726 = vst [vmem:[%s256 + $0x40] sm:$0xff] %v710
          %727 = vst [vmem:[%s256 + $0x48] sm:$0xff] %v711
          %728 = vst [vmem:[%s256 + $0x50] sm:$0xff] %v712
          %729 = vst [vmem:[%s256 + $0x58] sm:$0xff] %v713
          %730 = vst [vmem:[%s256 + $0x60] sm:$0xff] %v714
          %731 = vst [vmem:[%s256 + $0x68] sm:$0xff] %v715
          %732 = vst [vmem:[%s256 + $0x70] sm:$0xff] %v716
          %733 = vst [vmem:[%s256 + $0x78] sm:$0xff] %v717
        $region52: #{tpu_custom_call.1} parent=31 // pred_fallthru
          _
        %s734 = sand.u32 %s116, 1
        %s735 = scalar_lea.sflag [#allocation5], %s734
        %s736 = sand.u32 %s116, 1
        %s737 = smul.addr %s736, 128
        %s738 = scalar_lea.vmem [#allocation9], %s737
        // Predicated region
        $region53: #{tpu_custom_call.1} parent=31 // pred_check
          %p739 = pneg %p126
        $region54: #{tpu_custom_call.1} parent=31 // pred_check_branch
          %741 = sbr.rel (%p739) target = $region56
        $region55: #{tpu_custom_call.1} parent=31 // pred_region
          %s742 = smul.u32 16, %s25
          %s744 = ssub.s32 2048, 2048
          %745 = vsyncadd %s735, %s744
          %s746 = smul.addr %s742, 128
          %s747 = scalar_lea.hbm %s3, %s746
          %s748 = sshll.u32 %s738, 4
          %s749 = int_to_ptr.vmem [resolvable:$true] %s748
          %754 = dma.vmem_to_hbm [thread:$0]  %s749, 2048, %s747, %s735, 128, 128, 8
        $region56: #{tpu_custom_call.1} parent=31 // pred_fallthru
          _
      $region32: #{tpu_custom_call.1} parent=5 // pred_fallthru
        _
      %p755 = scmp.le.s32.totalorder 2, %s16
      // Predicated region
      $region57: #{tpu_custom_call.1} parent=5 // pred_check
        %p756 = pneg %p755
      $region58: #{tpu_custom_call.1} parent=5 // pred_check_branch
        %758 = sbr.rel (%p756) target = $region60
      $region59: #{tpu_custom_call.1} parent=5 // pred_region
        %s759 = ssub.s32 %s16, 2
        // Predicated region
        $region61: #{tpu_custom_call.1} parent=59 // pred_check
          %p760 = pneg %p132
        $region62: #{tpu_custom_call.1} parent=59 // pred_check_branch
          %762 = sbr.rel (%p760) target = $region64
        $region63: #{tpu_custom_call.1} parent=59 // pred_region
          %s763 = sand.u32 %s117, 1
          %s764 = scalar_lea.sflag [#allocation5], %s763
          %s765 = sand.u32 %s117, 1
          %s766 = smul.addr %s765, 128
          %s767 = scalar_lea.vmem [#allocation9], %s766
          %768 = dma.done %s764, 2048
        $region64: #{tpu_custom_call.1} parent=59 // pred_fallthru
          _
      $region60: #{tpu_custom_call.1} parent=5 // pred_fallthru
        _
    $region6: #{tpu_custom_call.1} parent=1 // loop_footer
      %s20 = sadd.s32 1, %s16
    $region7: #{tpu_custom_call.1} parent=1 // loop_footer_branch
      %15 = sbr.rel target = $region3
    $region8: #{tpu_custom_call.1} parent=1 // loop_exit
      _
    %769 = vsyncpa [#allocation4], 1
    %s770 = scalar_lea.sflag [#allocation4], 1
    %771 = vsyncpa %s770, 1
    %772 = vsyncpa [#allocation7], 1
    %773 = vsyncpa [#allocation5], 1
    %s774 = scalar_lea.sflag [#allocation5], 1
    %775 = vsyncpa %s774, 1

</llo_original>
